<compile_context>
chip_gen: v7x
topology: tpu7x:2x2x1
jax: 0.10.0
libtpu: 0.0.40
codegen_flags: <defaults>
</compile_context>

<pallas_src>
import numpy as np
import jax
import jax.numpy as jnp
from jax.experimental import pallas as pl
from jax.experimental.pallas import tpu as pltpu


_MAX_BLOCK_ROWS = 4096


def _round_up(x, m):
    return ((x + m - 1) // m) * m


# --------------------------------------------------------------------------- #
# Kernel: per-row -log_softmax(logits)[target] for one (TB, C) tile.
# --------------------------------------------------------------------------- #
def _cb_ce_kernel(logits_ref, targets_ref, nll_ref):
    x = logits_ref[...].astype(jnp.float32)        # [TB, C] native dtype -> f32
    tgt = targets_ref[...]                         # [TB, 1] int32
    tb, c = x.shape

    # Numerically stable log-sum-exp along the lane (class) axis.
    m = jnp.max(x, axis=-1, keepdims=True)                             # [TB, 1]
    lse = jnp.log(jnp.sum(jnp.exp(x - m), axis=-1, keepdims=True))     # [TB, 1]

    # Gather the target logit with a boolean lane-select + lane reduce
    # (no one-hot f32 tile, no full log-probability tile materialized).
    col = jax.lax.broadcasted_iota(jnp.int32, (tb, c), 1)
    x_t = jnp.sum(jnp.where(col == tgt, x, 0.0), axis=-1, keepdims=True)

    # -log_softmax(x)[t] = (m + lse) - x[t]
    nll_ref[...] = (m + lse) - x_t


# --------------------------------------------------------------------------- #
# Tiling / VMEM heuristics.
# --------------------------------------------------------------------------- #
def _vmem_limit_bytes():
    cap = 64 << 20
    try:
        cap = int(getattr(pltpu.get_tpu_info(), "vmem_capacity_bytes", cap))
    except Exception:
        pass
    # Leave headroom below physical VMEM (v7x: 64 MiB/TC, v5e/v6e: 128 MiB).
    return int(min(96 << 20, max(32 << 20, (cap * 3) // 4)))


def _pick_block_rows(batch, n_classes, itemsize, vmem_limit):
    # Row alignment = sublane pack of the native input dtype (8/16/32).
    row_align = max(8, 32 // max(1, itemsize))
    # Per-row VMEM footprint: double-buffered native-dtype input tile plus
    # ~4 live f32-sized (TB, C) temporaries inside the kernel.
    per_row = n_classes * (2 * itemsize + 4 * 4) + 16
    budget = max(vmem_limit - (4 << 20), vmem_limit // 2)
    tb = max(row_align, (budget // per_row) // row_align * row_align)
    tb = min(tb, _MAX_BLOCK_ROWS)
    # Keep >= 2 grid tiles when possible so the "parallel" grid axis can be
    # split across both TensorCores on v7x (no effect on v5e/v6e).
    half = _round_up(-(-batch // 2), row_align)
    tb = min(tb, max(row_align, half))
    return tb


# --------------------------------------------------------------------------- #
# Wrappers.
# --------------------------------------------------------------------------- #
def _xla_per_row_nll(logits, targets_i32):
    logp = jax.nn.log_softmax(logits.astype(jnp.float32), axis=-1)
    return -jnp.take_along_axis(logp, targets_i32[:, None], axis=-1)[:, 0]


def _pallas_per_row_nll(logits, targets_i32, block_rows=None):
    B, C = logits.shape
    itemsize = jnp.dtype(logits.dtype).itemsize
    vmem_limit = _vmem_limit_bytes()
    tb = int(block_rows) if block_rows is not None else _pick_block_rows(
        B, C, itemsize, vmem_limit)
    n_tiles = -(-B // tb)
    b_pad = n_tiles * tb

    cost = pl.CostEstimate(
        flops=5 * B * C,
        transcendentals=B * C,
        bytes_accessed=B * C * itemsize + B * 4 + b_pad * 4,
    )

    nll_pad = pl.pallas_call(
        _cb_ce_kernel,
        out_shape=jax.ShapeDtypeStruct((b_pad, 1), jnp.float32),
        grid_spec=pltpu.PrefetchScalarGridSpec(
            num_scalar_prefetch=0,
            grid=(n_tiles,),
            in_specs=[
                pl.BlockSpec((tb, C), lambda i: (i, 0)),   # logits (native dtype)
                pl.BlockSpec((tb, 1), lambda i: (i, 0)),   # targets
            ],
            out_specs=pl.BlockSpec((tb, 1), lambda i: (i, 0)),
        ),
        compiler_params=pltpu.CompilerParams(
            dimension_semantics=("parallel",),
            vmem_limit_bytes=vmem_limit,
        ),
        cost_estimate=cost,
    )(logits, targets_i32.reshape(B, 1))

    # Rows >= B of the padded last tile are garbage and are never read.
    return nll_pad[:B, 0]


def class_balanced_cross_entropy(logits, targets, weights, reduction="mean",
                                 block_rows=None, min_pallas_classes=128):
    """CB-CE loss. logits [B, C] (any float dtype), targets [B] int, weights [C].

    Matches torch.nn.functional.cross_entropy(..., weight=weights):
      mean: sum_i w[t_i]*nll_i / sum_i w[t_i];  sum: sum_i w[t_i]*nll_i;
      none: w[t_i]*nll_i per sample.
    Note: out-of-range targets are not checked (PyTorch would raise).
    """
    B, C = logits.shape
    targets_i32 = targets.astype(jnp.int32)
    weights_f32 = weights.astype(jnp.float32)

    if C < min_pallas_classes:
        # Tiny class counts use < 1 vreg lane row; plain XLA is the right tool.
        nll = _xla_per_row_nll(logits, targets_i32)
    else:
        nll = _pallas_per_row_nll(logits, targets_i32, block_rows)

    w_t = weights_f32[targets_i32]           # O(B) gather in the XLA epilogue
    wnll = w_t * nll
    if reduction == "mean":
        return jnp.sum(wnll) / jnp.sum(w_t)
    if reduction == "sum":
        return jnp.sum(wnll)
    return wnll                              # 'none'


def make_cb_weights(samples_per_cls, beta=0.999):
    """Deterministic weight init exactly as in the PyTorch __init__."""
    samples_per_cls = np.asarray(samples_per_cls, dtype=np.float64)
    eff_num = 1.0 - np.power(beta, samples_per_cls)
    weights = (1.0 - beta) / eff_num
    weights = weights / weights.sum() * len(samples_per_cls)
    return jnp.asarray(weights, dtype=jnp.float32)


# --------------------------------------------------------------------------- #
# Self-test.
# --------------------------------------------------------------------------- #
if __name__ == "__main__":
    key = jax.random.PRNGKey(0)
    k_logits, k_targets = jax.random.split(key)

    # Pallas path: B not a multiple of the tile (exercises the remainder tile),
    # C large enough to fill vreg lanes.
    B, C = 37, 256
    beta = 0.999
    samples_per_cls = (np.arange(C) % 7 + 1) * 20
    weights = make_cb_weights(samples_per_cls, beta)

    logits = jax.random.normal(k_logits, (B, C), dtype=jnp.float32)
    targets = jax.random.randint(k_targets, (B,), 0, C, dtype=jnp.int32)

    # Pure-JAX reference (PyTorch weighted cross-entropy semantics).
    logp = jax.nn.log_softmax(logits, axis=-1)
    w_t = weights[targets]
    nll_ref = -logp[jnp.arange(B), targets]
    ref_mean = jnp.sum(w_t * nll_ref) / jnp.sum(w_t)
    ref_sum = jnp.sum(w_t * nll_ref)
    ref_none = w_t * nll_ref

    loss_mean = jax.block_until_ready(
        class_balanced_cross_entropy(logits, targets, weights, "mean"))
    loss_sum = jax.block_until_ready(
        class_balanced_cross_entropy(logits, targets, weights, "sum"))
    loss_none = jax.block_until_ready(
        class_balanced_cross_entropy(logits, targets, weights, "none"))
    assert jnp.allclose(loss_mean, ref_mean, rtol=1e-4, atol=1e-4), (loss_mean, ref_mean)
    assert jnp.allclose(loss_sum, ref_sum, rtol=1e-4, atol=1e-4), (loss_sum, ref_sum)
    assert jnp.allclose(loss_none, ref_none, rtol=1e-4, atol=1e-4)

    # Native bf16 logits (no wrapper up-cast; kernel casts inside VMEM).
    logits_bf16 = logits.astype(jnp.bfloat16)
    loss_bf16 = jax.block_until_ready(
        class_balanced_cross_entropy(logits_bf16, targets, weights, "mean"))
    logp_bf16 = jax.nn.log_softmax(logits_bf16.astype(jnp.float32), axis=-1)
    ref_bf16 = jnp.sum(-w_t * logp_bf16[jnp.arange(B), targets]) / jnp.sum(w_t)
    assert jnp.allclose(loss_bf16, ref_bf16, rtol=1e-3, atol=1e-3), (loss_bf16, ref_bf16)

    # Small-C case (as in the module's typical usage, C=4): XLA fallback path.
    B2, C2 = 8, 4
    w2 = make_cb_weights([100, 50, 20, 5], beta)
    lg2 = jax.random.normal(jax.random.PRNGKey(1), (B2, C2), dtype=jnp.float32)
    tg2 = jax.random.randint(jax.random.PRNGKey(2), (B2,), 0, C2, dtype=jnp.int32)
    loss2 = jax.block_until_ready(
        class_balanced_cross_entropy(lg2, tg2, w2, "mean"))
    logp2 = jax.nn.log_softmax(lg2, axis=-1)
    wt2 = w2[tg2]
    ref2 = jnp.sum(-wt2 * logp2[jnp.arange(B2), tg2]) / jnp.sum(wt2)
    assert jnp.allclose(loss2, ref2, rtol=1e-5, atol=1e-5), (loss2, ref2)

    print("KERNEL_OK")
</pallas_src>

<mosaic_0001>
module attributes {stable_mosaic.version = 11 : i64} {
  func.func @_cb_ce_kernel(%arg0: i32, %arg1: memref<24x256xf32, #tpu.memory_space<vmem>>, %arg2: memref<24x1xi32, #tpu.memory_space<vmem>>, %arg3: memref<24x1xf32, #tpu.memory_space<vmem>>) attributes {dimension_semantics = [#tpu.dimension_semantics<parallel>], iteration_bounds = array<i64: 2>, scalar_prefetch = 0 : i64, scratch_operands = 0 : i64, tpu.core_type = #tpu.core_type<tc>, window_params = [{transform_indices = @transform_0, window_bounds = array<i64: 24, 256>}, {transform_indices = @transform_1, window_bounds = array<i64: 24, 1>}, {transform_indices = @transform_2, window_bounds = array<i64: 24, 1>}]} {
    %c0 = arith.constant 0 : index
    %c0_0 = arith.constant 0 : index
    %0 = vector.load %arg1[%c0, %c0_0] : memref<24x256xf32, #tpu.memory_space<vmem>>, vector<24x256xf32>
    %c0_1 = arith.constant 0 : index
    %c0_2 = arith.constant 0 : index
    %1 = vector.load %arg2[%c0_1, %c0_2] : memref<24x1xi32, #tpu.memory_space<vmem>>, vector<24x1xi32>
    %cst = arith.constant dense<0xFF800000> : vector<24xf32>
    %2 = vector.multi_reduction <maximumf>, %0, %cst [1] : vector<24x256xf32> to vector<24xf32>
    %3 = vector.shape_cast %2 : vector<24xf32> to vector<24x1xf32>
    %4 = vector.broadcast %3 : vector<24x1xf32> to vector<24x256xf32>
    %5 = arith.subf %0, %4 : vector<24x256xf32>
    %6 = math.exp %5 : vector<24x256xf32>
    %cst_3 = arith.constant dense<0.000000e+00> : vector<24xf32>
    %7 = vector.multi_reduction <add>, %6, %cst_3 [1] : vector<24x256xf32> to vector<24xf32>
    %8 = vector.shape_cast %7 : vector<24xf32> to vector<24x1xf32>
    %9 = math.log %8 : vector<24x1xf32>
    %10 = tpu.iota {dimensions = array<i32: 1>} : vector<24x256xi32>
    %11 = vector.broadcast %1 : vector<24x1xi32> to vector<24x256xi32>
    %12 = arith.cmpi eq, %10, %11 : vector<24x256xi32>
    %cst_4 = arith.constant 0.000000e+00 : f32
    %13 = vector.broadcast %cst_4 : f32 to vector<24x256xf32>
    %14 = arith.select %12, %0, %13 : vector<24x256xi1>, vector<24x256xf32>
    %cst_5 = arith.constant dense<0.000000e+00> : vector<24xf32>
    %15 = vector.multi_reduction <add>, %14, %cst_5 [1] : vector<24x256xf32> to vector<24xf32>
    %16 = vector.shape_cast %15 : vector<24xf32> to vector<24x1xf32>
    %17 = arith.addf %3, %9 : vector<24x1xf32>
    %18 = arith.subf %17, %16 : vector<24x1xf32>
    %c0_6 = arith.constant 0 : index
    %c0_7 = arith.constant 0 : index
    %19 = vector.load %arg3[%c0_6, %c0_7] : memref<24x1xf32, #tpu.memory_space<vmem>>, vector<24x1xf32>
    tpu.vector_store %arg3[%c0_6, %c0_7], %18 {strides = array<i32>} : memref<24x1xf32, #tpu.memory_space<vmem>>, vector<24x1xf32>,
    return
  }
  func.func @transform_0(%arg0: i32) -> (i32, i32) {
    %c0_i32 = arith.constant 0 : i32
    %c0_i32_0 = arith.constant 0 : i32
    return %arg0, %c0_i32 : i32, i32
  }
  func.func @transform_1(%arg0: i32) -> (i32, i32) {
    %c0_i32 = arith.constant 0 : i32
    %c0_i32_0 = arith.constant 0 : i32
    return %arg0, %c0_i32 : i32, i32
  }
  func.func @transform_2(%arg0: i32) -> (i32, i32) {
    %c0_i32 = arith.constant 0 : i32
    %c0_i32_0 = arith.constant 0 : i32
    return %arg0, %c0_i32 : i32, i32
  }
}

</mosaic_0001>

<llo_original>
// kernel: tpu_custom_call.1
$region0: #{tpu_custom_call.1}
  #allocation0 [shape = 'u32[]', space=smem, size = 0x4, offset = 0x4, fixed_abs, tag = 'smem constant byte address 0x4 - core index']
  #allocation1 [shape = 'u32[144,128]{1,0:T(1,128)}', space=vmem, size = 0x12000, scoped, tag = 'internal scratch']
  %s0 = inlined_call_operand.hbm [shape: f32[37,256], index: 0, kind: input, shape index: {}]
  %s1 = inlined_call_operand.vmem [shape: s32[37,1], index: 1, kind: input, shape index: {}]
  %s2 = inlined_call_operand.vmem [shape: f32[48,1], index: 2, kind: output, shape index: {}]
  %s3 = sld [smem:[#allocation0]]
  $region45: #{tpu_custom_call.1} parent=0
    _
  %s5 = ssub.s32 1, %s3
  %s6 = scalar_select 0, %s5, %s3
  $region1: #{tpu_custom_call.1} parent=0
    #allocation2 [shape = 'u8[49152]{0}', space=vmem, size = 0xc000, scoped, tag = 'input window, operand 0']
    #allocation3 [shape = 's32[2]{0}', space=sflag, size = 0x8, scoped, tag = 'scoped memory for tpu_custom_call.1']
    %7 = vsyncpa [#allocation3], 0
    %s8 = scalar_lea.sflag [#allocation3], 1
    %9 = vsyncpa %s8, 0
    loop: start=0, step=1, limit=4
    $region2: #{tpu_custom_call.1} parent=1 // loop_pre_header
      _
    $region3: #{tpu_custom_call.1} parent=1 // loop_header
      %s11 = sphi 0, %s15
      %p12 = scmp.ge.s32.totalorder %s11, 4
      %s21 = sphi 0, %s23
      %s24 = sphi 0, %s21
      %s25 = sphi 0, %s24
      %s41 = sphi 0, %s25
      %s47 = sphi 0, %s49
      %s50 = sphi 0, %s47
      %s51 = sphi 0, %s50
      %s67 = sphi 0, %s51
      %s73 = sphi 0, %s75
      %s76 = sphi 0, %s73
      %s77 = sphi 0, %s76
      %s93 = sphi 0, %s77
    $region4: #{tpu_custom_call.1} parent=1 // loop_header_branch
      %14 = sbr.rel (%p12) target = $region8
    $region5: #{tpu_custom_call.1} parent=1 // loop_body
      %s16 = ssub.s32 %s11, 1
      %s17 = ssub.s32 %s11, 2
      %s18 = sadd.s32 %s11, 1
      %s19 = ssub.s32 %s11, %s18
      %p20 = scmp.eq.s32.totalorder %s19, 0
      %s22 = sadd.s32 %s21, 1
      %s23 = scalar_select %p20, %s21, %s22
      %p26 = pneg %p20
      %p27 = scmp.eq.s32.totalorder %s11, 1
      %p28 = por %p26, %p27
      %p29 = scmp.ne.s32.totalorder %s21, %s24
      %p30 = scmp.eq.s32.totalorder %s11, 0
      %p31 = por %p29, %p30
      %p32 = scmp.ne.s32.totalorder %s21, %s24
      %p33 = scmp.eq.s32.totalorder %s16, 1
      %p34 = por %p32, %p33
      %p35 = scmp.ne.s32.totalorder %s24, %s25
      %p36 = scmp.eq.s32.totalorder %s16, 0
      %p37 = por %p35, %p36
      %p38 = scmp.ne.s32.totalorder %s24, %s25
      %p39 = scmp.eq.s32.totalorder %s17, 1
      %p40 = por %p38, %p39
      %p42 = scmp.ne.s32.totalorder %s25, %s41
      %p43 = scmp.eq.s32.totalorder %s17, 0
      %p44 = por %p42, %p43
      %s45 = ssub.s32 %s11, %s18
      %p46 = scmp.eq.s32.totalorder %s45, 0
      %s48 = sadd.s32 %s47, 1
      %s49 = scalar_select %p46, %s47, %s48
      %p52 = pneg %p46
      %p53 = scmp.eq.s32.totalorder %s11, 1
      %p54 = por %p52, %p53
      %p55 = scmp.ne.s32.totalorder %s47, %s50
      %p56 = scmp.eq.s32.totalorder %s11, 0
      %p57 = por %p55, %p56
      %p58 = scmp.ne.s32.totalorder %s47, %s50
      %p59 = scmp.eq.s32.totalorder %s16, 1
      %p60 = por %p58, %p59
      %p61 = scmp.ne.s32.totalorder %s50, %s51
      %p62 = scmp.eq.s32.totalorder %s16, 0
      %p63 = por %p61, %p62
      %p64 = scmp.ne.s32.totalorder %s50, %s51
      %p65 = scmp.eq.s32.totalorder %s17, 1
      %p66 = por %p64, %p65
      %p68 = scmp.ne.s32.totalorder %s51, %s67
      %p69 = scmp.eq.s32.totalorder %s17, 0
      %p70 = por %p68, %p69
      %s71 = ssub.s32 %s11, %s18
      %p72 = scmp.eq.s32.totalorder %s71, 0
      %s74 = sadd.s32 %s73, 1
      %s75 = scalar_select %p72, %s73, %s74
      %p78 = pneg %p72
      %p79 = scmp.eq.s32.totalorder %s11, 1
      %p80 = por %p78, %p79
      %p81 = scmp.ne.s32.totalorder %s73, %s76
      %p82 = scmp.eq.s32.totalorder %s11, 0
      %p83 = por %p81, %p82
      %p84 = scmp.ne.s32.totalorder %s73, %s76
      %p85 = scmp.eq.s32.totalorder %s16, 1
      %p86 = por %p84, %p85
      %p87 = scmp.ne.s32.totalorder %s76, %s77
      %p88 = scmp.eq.s32.totalorder %s16, 0
      %p89 = por %p87, %p88
      %p90 = scmp.ne.s32.totalorder %s76, %s77
      %p91 = scmp.eq.s32.totalorder %s17, 1
      %p92 = por %p90, %p91
      %p94 = scmp.ne.s32.totalorder %s77, %s93
      %p95 = scmp.eq.s32.totalorder %s17, 0
      %p96 = por %p94, %p95
      %p97 = scmp.le.s32.totalorder 1, %s11
      %p98 = scmp.lt.s32.totalorder %s11, 3
      %p99 = pnand %p97, %p98
      %p100 = pneg %p99
      // Predicated region
      $region9: #{tpu_custom_call.1} parent=5 // pred_check
        _
      $region10: #{tpu_custom_call.1} parent=5 // pred_check_branch
        %102 = sbr.rel (%p99) target = $region12
      $region11: #{tpu_custom_call.1} parent=5 // pred_region
        %s103 = ssub.s32 %s11, 1
      $region12: #{tpu_custom_call.1} parent=5 // pred_fallthru
        _
      %p104 = scmp.lt.s32.totalorder %s11, 2
      // Predicated region
      $region13: #{tpu_custom_call.1} parent=5 // pred_check
        %p105 = pneg %p104
      $region14: #{tpu_custom_call.1} parent=5 // pred_check_branch
        %107 = sbr.rel (%p105) target = $region16
      $region15: #{tpu_custom_call.1} parent=5 // pred_region
        // Predicated region
        $region17: #{tpu_custom_call.1} parent=15 // pred_check
          %p108 = pneg %p31
        $region18: #{tpu_custom_call.1} parent=15 // pred_check_branch
          %110 = sbr.rel (%p108) target = $region20
        $region19: #{tpu_custom_call.1} parent=15 // pred_region
          %s111 = sand.u32 %s21, 1
          %s112 = scalar_lea.sflag [#allocation3], %s111
          %s113 = sand.u32 %s21, 1
          %s114 = smul.addr %s113, 48
          %s115 = scalar_lea.vmem [#allocation2], %s114
          %s116 = smul.u32 3, %s11
          %s117 = ssub.s32 5, %s116
          %p118 = scmp.lt.s32.totalorder %s117, 3
          %s119 = scalar_select %p118, %s117, 3
          %s120 = smul.u32 128, %s119
          %s121 = smul.u32 %s120, 2
          %s123 = ssub.s32 768, %s121
          %124 = vsyncadd %s112, %s123
          %p125 = scmp.ne.s32.totalorder 0, %s121
          %s126 = smul.addr %s116, 2
          %s127 = smul.addr %s126, 128
          %s128 = scalar_lea.hbm %s0, %s127
          %s129 = smul.u32 16, %s119
          %s130 = sshll.u32 %s115, 4
          %s131 = int_to_ptr.vmem [resolvable:$true] %s130
          %s132 = sshll.u32 %s129, 4
          %136 = dma.hbm_to_vmem [thread:$0]  (%p125), %s128, %s132, %s131, %s112, 256, 256, 16
        $region20: #{tpu_custom_call.1} parent=15 // pred_fallthru
          _
        // Predicated region
        $region21: #{tpu_custom_call.1} parent=15 // pred_check
          %p137 = pneg %p57
        $region22: #{tpu_custom_call.1} parent=15 // pred_check_branch
          %139 = sbr.rel (%p137) target = $region24
        $region23: #{tpu_custom_call.1} parent=15 // pred_region
          %s140 = smul.u32 3, %s11
          %s141 = ssub.s32 5, %s140
          %p142 = scmp.lt.s32.totalorder %s141, 3
          %s143 = scalar_select %p142, %s141, 3
          %s144 = smul.u32 128, %s143
          %p145 = scmp.lt.s32.totalorder %s140, 4
          %s146 = scalar_select %p145, %s140, 4
          %s147 = smul.addr %s146, 8
          %s148 = scalar_lea.vmem %s1, %s147
          %s149 = smul.u32 3, %s11
          %s150 = ssub.s32 5, %s149
          %p151 = scmp.lt.s32.totalorder %s150, 3
          %s152 = scalar_select %p151, %s150, 3
          %s153 = smul.u32 128, %s152
        $region24: #{tpu_custom_call.1} parent=15 // pred_fallthru
          _
      $region16: #{tpu_custom_call.1} parent=5 // pred_fallthru
        _
      %p154 = scmp.le.s32.totalorder 1, %s11
      %p155 = scmp.lt.s32.totalorder %s11, 3
      %p156 = pnand %p154, %p155
      %p157 = pneg %p156
      // Predicated region
      $region25: #{tpu_custom_call.1} parent=5 // pred_check
        _
      $region26: #{tpu_custom_call.1} parent=5 // pred_check_branch
        %159 = sbr.rel (%p156) target = $region28
      $region27: #{tpu_custom_call.1} parent=5 // pred_region
        %s160 = ssub.s32 %s11, 1
        %s161 = sand.u32 %s24, 1
        %s162 = scalar_lea.sflag [#allocation3], %s161
        %s163 = sand.u32 %s24, 1
        %s164 = smul.addr %s163, 48
        %s165 = scalar_lea.vmem [#allocation2], %s164
        // Predicated region
        $region29: #{tpu_custom_call.1} parent=27 // pred_check
          %p166 = pneg %p37
        $region30: #{tpu_custom_call.1} parent=27 // pred_check_branch
          %168 = sbr.rel (%p166) target = $region32
        $region31: #{tpu_custom_call.1} parent=27 // pred_region
          %169 = dma.done %s162, 768
        $region32: #{tpu_custom_call.1} parent=27 // pred_fallthru
          _
        %s170 = sand.u32 %s24, 1
        %s171 = scalar_lea.sflag [#allocation3], %s170
        %s172 = sand.u32 %s24, 1
        %s173 = smul.addr %s172, 48
        %s174 = scalar_lea.vmem [#allocation2], %s173
        %p175 = pneg %p37
        %p176 = pneg %p34
        %s177 = smul.u32 3, %s16
        %s178 = ssub.s32 5, %s177
        %p179 = scmp.lt.s32.totalorder %s178, 3
        %s180 = scalar_select %p179, %s178, 3
        %s181 = smul.u32 128, %s180
        %p182 = scmp.lt.s32.totalorder %s177, 4
        %s183 = scalar_select %p182, %s177, 4
        %s184 = smul.addr %s183, 8
        %s185 = scalar_lea.vmem %s1, %s184
        %p186 = pneg %p63
        %p187 = pneg %p60
        %p188 = pneg %p89
        %p189 = pneg %p86
        %s190 = smul.u32 3, %s16
        %p191 = scmp.lt.s32.totalorder %s190, 5
        %s192 = scalar_select %p191, %s190, 5
        %s193 = smul.addr %s192, 8
        %s194 = scalar_lea.vmem %s2, %s193
        %s195 = smul.u32 3, %s16
        %s196 = ssub.s32 5, %s195
        %p197 = scmp.lt.s32.totalorder %s196, 3
        %s198 = scalar_select %p197, %s196, 3
        %s199 = smul.u32 128, %s198
        %s200 = smul.u32 %s199, 2
        %s201 = smul.u32 3, %s16
        %s202 = ssub.s32 5, %s201
        %p203 = scmp.lt.s32.totalorder %s202, 3
        %s204 = scalar_select %p203, %s202, 3
        %s205 = smul.u32 128, %s204
        %p206 = scmp.lt.s32.totalorder %s201, 4
        %s207 = scalar_select %p206, %s201, 4
        %s208 = smul.addr %s207, 8
        %s209 = scalar_lea.vmem %s1, %s208
        %s210 = smul.u32 3, %s16
        %s211 = ssub.s32 5, %s210
        %p212 = scmp.lt.s32.totalorder %s211, 3
        %s213 = scalar_select %p212, %s211, 3
        %s214 = smul.u32 128, %s213
        %s215 = smul.u32 3, %s16
        %p216 = scmp.lt.s32.totalorder %s215, 5
        %s217 = scalar_select %p216, %s215, 5
        %s218 = smul.addr %s217, 8
        %s219 = scalar_lea.vmem %s2, %s218
        %s220 = smul.u32 3, %s16
        %v221 = vld [vmem:[%s165] sm:$0xff]
        %v222 = vld [vmem:[%s165 + $0x8] sm:$0xff]
        %v223 = vld [vmem:[%s165 + $0x10] sm:$0xff]
        %v224 = vld [vmem:[%s165 + $0x18] sm:$0xff]
        %v225 = vld [vmem:[%s165 + $0x20] sm:$0xff]
        %v226 = vld [vmem:[%s165 + $0x28] sm:$0xff]
        %v227 = vld [vmem:[%s209] sm:$0xff]
        %v228 = vld [vmem:[%s209 + $0x8] sm:$0xff]
        %v229 = vld [vmem:[%s209 + $0x10] sm:$0xff]
        %v230 = vmax.f32 %v221, %v222
        %231 = vmax.xlane.f32.xlu0 %v230
        %v232 = vpop.xlane.xlu0 %231
        %v233 = vmax.f32 %v223, %v224
        %234 = vmax.xlane.f32.xlu0 %v233
        %v235 = vpop.xlane.xlu0 %234
        %v236 = vmax.f32 %v225, %v226
        %237 = vmax.xlane.f32.xlu0 %v236
        %v238 = vpop.xlane.xlu0 %237
        %v239 = vsub.f32 %v221, %v232
        %v240 = vsub.f32 %v222, %v232
        %v241 = vsub.f32 %v223, %v235
        %v242 = vsub.f32 %v224, %v235
        %v243 = vsub.f32 %v225, %v238
        %v244 = vsub.f32 %v226, %v238
        %v245 = vmul.f32 %v239, 1.442695
        %v246 = vpow.pop %v245
        %v247 = vmul.f32 %v240, 1.442695
        %v248 = vpow.pop %v247
        %v249 = vmul.f32 %v241, 1.442695
        %v250 = vpow.pop %v249
        %v251 = vmul.f32 %v242, 1.442695
        %v252 = vpow.pop %v251
        %v253 = vmul.f32 %v243, 1.442695
        %v254 = vpow.pop %v253
        %v255 = vmul.f32 %v244, 1.442695
        %v256 = vpow.pop %v255
        %v257 = vadd.f32 %v246, %v248
        %258 = vadd.xlane.f32.xlu0 %v257
        %v259 = vpop.xlane.xlu0 %258
        %v260 = vadd.f32 %v250, %v252
        %261 = vadd.xlane.f32.xlu0 %v260
        %v262 = vpop.xlane.xlu0 %261
        %v263 = vadd.f32 %v254, %v256
        %264 = vadd.xlane.f32.xlu0 %v263
        %v265 = vpop.xlane.xlu0 %264
        %v266 = vlog2.pop %v259
        %v267 = vmul.f32 %v266, 0.6931472
        %v268 = vlog2.pop %v262
        %v269 = vmul.f32 %v268, 0.6931472
        %v270 = vlog2.pop %v265
        %v271 = vmul.f32 %v270, 0.6931472
        %v272 = vlaneseq
        %v273 = vand.u32 %v272, 127
        %v274 = vadd.s32 %v273, 128
        %275 = vset.pattern.permute.xlu0 0
        %276 = vperm.xlu0 %275, %v227
        %v277 = vpop.permute.xlu0 %276
        %278 = vset.pattern.permute.xlu0 0
        %279 = vperm.xlu0 %278, %v228
        %v280 = vpop.permute.xlu0 %279
        %281 = vset.pattern.permute.xlu0 0
        %282 = vperm.xlu0 %281, %v229
        %v283 = vpop.permute.xlu0 %282
        %vm284 = vcmp.eq.s32.totalorder %v273, %v277
        %vm285 = vcmp.eq.s32.totalorder %v274, %v277
        %vm286 = vcmp.eq.s32.totalorder %v273, %v280
        %vm287 = vcmp.eq.s32.totalorder %v274, %v280
        %vm288 = vcmp.eq.s32.totalorder %v273, %v283
        %vm289 = vcmp.eq.s32.totalorder %v274, %v283
        %v290 = vsel %vm284, %v221, 0.0
        %v291 = vsel %vm285, %v222, 0.0
        %v292 = vsel %vm286, %v223, 0.0
        %v293 = vsel %vm287, %v224, 0.0
        %v294 = vsel %vm288, %v225, 0.0
        %v295 = vsel %vm289, %v226, 0.0
        %v296 = vadd.f32 %v290, %v291
        %297 = vadd.xlane.f32.xlu0 %v296
        %v298 = vpop.xlane.xlu0 %297
        %v299 = vadd.f32 %v292, %v293
        %300 = vadd.xlane.f32.xlu0 %v299
        %v301 = vpop.xlane.xlu0 %300
        %v302 = vadd.f32 %v294, %v295
        %303 = vadd.xlane.f32.xlu0 %v302
        %v304 = vpop.xlane.xlu0 %303
        %v305 = vadd.f32 %v232, %v267
        %v306 = vadd.f32 %v235, %v269
        %v307 = vadd.f32 %v238, %v271
        %v308 = vsub.f32 %v305, %v298
        %v309 = vsub.f32 %v306, %v301
        %v310 = vsub.f32 %v307, %v304
        %vm311 = vcmask 7168
        %312 = vst.msk [vmem:[%s219] sm:$0xff] %vm311, %v308
        %313 = vst.msk [vmem:[%s219 + $0x8] sm:$0xff] %vm311, %v309
        %314 = vst.msk [vmem:[%s219 + $0x10] sm:$0xff] %vm311, %v310
        %s315 = smul.u32 3, %s16
        %p316 = scmp.lt.s32.totalorder %s315, 5
        %s317 = scalar_select %p316, %s315, 5
        %s318 = smul.addr %s317, 8
        %s319 = scalar_lea.vmem %s2, %s318
        // Predicated region
        $region33: #{tpu_custom_call.1} parent=27 // pred_check
          %p320 = pneg %p86
        $region34: #{tpu_custom_call.1} parent=27 // pred_check_branch
          %322 = sbr.rel (%p320) target = $region36
        $region35: #{tpu_custom_call.1} parent=27 // pred_region
          %s323 = smul.u32 3, %s16
        $region36: #{tpu_custom_call.1} parent=27 // pred_fallthru
          _
      $region28: #{tpu_custom_call.1} parent=5 // pred_fallthru
        _
      %p324 = scmp.le.s32.totalorder 2, %s11
      // Predicated region
      $region37: #{tpu_custom_call.1} parent=5 // pred_check
        %p325 = pneg %p324
      $region38: #{tpu_custom_call.1} parent=5 // pred_check_branch
        %327 = sbr.rel (%p325) target = $region40
      $region39: #{tpu_custom_call.1} parent=5 // pred_region
        %s328 = ssub.s32 %s11, 2
        // Predicated region
        $region41: #{tpu_custom_call.1} parent=39 // pred_check
          %p329 = pneg %p92
        $region42: #{tpu_custom_call.1} parent=39 // pred_check_branch
          %331 = sbr.rel (%p329) target = $region44
        $region43: #{tpu_custom_call.1} parent=39 // pred_region
          %s332 = smul.u32 3, %s17
          %p333 = scmp.lt.s32.totalorder %s332, 5
          %s334 = scalar_select %p333, %s332, 5
          %s335 = smul.addr %s334, 8
          %s336 = scalar_lea.vmem %s2, %s335
        $region44: #{tpu_custom_call.1} parent=39 // pred_fallthru
          _
      $region40: #{tpu_custom_call.1} parent=5 // pred_fallthru
        _
    $region6: #{tpu_custom_call.1} parent=1 // loop_footer
      %s15 = sadd.s32 1, %s11
    $region7: #{tpu_custom_call.1} parent=1 // loop_footer_branch
      %10 = sbr.rel target = $region3
    $region8: #{tpu_custom_call.1} parent=1 // loop_exit
      _
    %337 = vsyncpa [#allocation3], 1
    %s338 = scalar_lea.sflag [#allocation3], 1
    %339 = vsyncpa %s338, 1

</llo_original>
